<compile_context>
chip_gen: v7x
topology: tpu7x:2x2x1
jax: 0.10.0
libtpu: 0.0.40
codegen_flags: <defaults>
</compile_context>

<pallas_src>
import math

import jax
import jax.numpy as jnp
from jax.experimental import pallas as pl
from jax.experimental.pallas import tpu as pltpu


def _mlp_block_kernel(x_ref, w_ref, p_ref, o_ref):
    # x_ref: (tm, tk) bf16     input tile
    # w_ref: (tk, tn) bf16     weight tile, already (d_in, d_out) layout
    # p_ref: (3, tn)  f32      row 0 = linear bias, row 1 = BN scale, row 2 = BN shift
    # o_ref: (tm, tn) f32      output tile; doubles as the K accumulator
    k = pl.program_id(2)

    partial = jnp.dot(x_ref[...], w_ref[...], preferred_element_type=jnp.float32)

    @pl.when(k == 0)
    def _():
        o_ref[...] = partial          # direct assign: no zero-init store needed

    @pl.when(k > 0)
    def _():
        o_ref[...] += partial

    @pl.when(k == pl.num_programs(2) - 1)
    def _():
        b = p_ref[0:1, :]             # (1, tn), broadcasts over rows
        scale = p_ref[1:2, :]
        shift = p_ref[2:3, :]
        h = jnp.maximum(o_ref[...] + b, 0.0)      # bias + ReLU
        o_ref[...] = h * scale + shift            # folded BatchNorm1d (eval)
        # Dropout: identity in eval mode.


def prepare_mlp_block_params(weight, bias, gamma, beta, running_mean, running_var,
                             *, eps: float = 1e-5):
    """One-time parameter prep (call once at load time, NOT per forward call).

    Returns:
      wt_bf16:  (d_in, d_out) bf16 weight (transposed once here, not per call)
      packed:   (3, d_out) f32 [bias; bn_scale; bn_shift]
    """
    d_out, d_in = weight.shape
    wt_bf16 = jnp.asarray(weight).T.astype(jnp.bfloat16)
    inv_std = 1.0 / jnp.sqrt(running_var.astype(jnp.float32) + eps)
    scale = gamma.astype(jnp.float32) * inv_std
    shift = beta.astype(jnp.float32) - running_mean.astype(jnp.float32) * scale
    packed = jnp.stack([bias.astype(jnp.float32), scale, shift], axis=0)
    assert packed.shape == (3, d_out)
    return wt_bf16, packed


def _largest_tile(dim, candidates):
    for c in candidates:
        if dim % c == 0:
            return c
    return dim


def mlp_block_forward(x, wt_bf16, packed, *,
                      tm: int | None = None,
                      tn: int | None = None,
                      tk: int | None = None):
    """Fused Linear + ReLU + BatchNorm1d(eval) [+ Dropout(eval)=identity]."""
    M, d_in = x.shape
    d_in_w, d_out = wt_bf16.shape
    assert d_in == d_in_w, (d_in, d_in_w)
    assert packed.shape == (3, d_out)

    # bf16 operands for the MXU; accumulation stays f32 in-kernel.
    x_bf = x.astype(jnp.bfloat16)

    # --- tile selection: lane-dense (multiples of 128) on N/K, sublane-dense on M ---
    if tk is None:
        tk = _largest_tile(d_in, (512, 256, 128)) if d_in % 128 == 0 else d_in
    if tn is None:
        tn = _largest_tile(d_out, (512, 256, 128)) if d_out % 128 == 0 else d_out
    if tm is None:
        tm = _largest_tile(M, (512, 256, 128, 64, 32, 16, 8)) if M % 8 == 0 else M
    # Expose >= 2 parallel grid iterations when cheap, so v7x's 2 TensorCores are used.
    while (M // tm) * (d_out // tn) < 2 and tn >= 256 and d_out % (tn // 2) == 0:
        tn //= 2

    assert M % tm == 0 and d_out % tn == 0 and d_in % tk == 0, (
        "shapes must divide the chosen tile sizes", (M, d_out, d_in), (tm, tn, tk))
    # TODO(synk): pad/mask path for shapes that do not divide the tiles.

    grid = (M // tm, d_out // tn, d_in // tk)

    grid_spec = pltpu.PrefetchScalarGridSpec(
        num_scalar_prefetch=0,
        grid=grid,
        in_specs=[
            pl.BlockSpec((tm, tk), lambda i, j, k: (i, k)),   # x (bf16)
            pl.BlockSpec((tk, tn), lambda i, j, k: (k, j)),   # W (bf16, (d_in, d_out))
            pl.BlockSpec((3, tn), lambda i, j, k: (0, j)),    # packed bias/scale/shift
        ],
        out_specs=pl.BlockSpec((tm, tn), lambda i, j, k: (i, j)),
    )

    return pl.pallas_call(
        _mlp_block_kernel,
        out_shape=jax.ShapeDtypeStruct((M, d_out), jnp.float32),
        grid_spec=grid_spec,
        compiler_params=pltpu.CompilerParams(
            dimension_semantics=("parallel", "parallel", "arbitrary"),
        ),
    )(x_bf, wt_bf16, packed)


if __name__ == "__main__":
    # Small, (8,128)-friendly shapes consistent with the module's forward.
    M = 64        # batch
    d_in = 128
    d_out = 256
    eps = 1e-5

    key = jax.random.PRNGKey(0)
    k_x, k_w, k_g, k_b, k_m, k_v = jax.random.split(key, 6)

    x = jax.random.normal(k_x, (M, d_in), dtype=jnp.float32)

    # nn.Linear params: xavier_uniform_ weight, zeros bias (per weights_init).
    limit = math.sqrt(6.0 / (d_in + d_out))
    weight = jax.random.uniform(
        k_w, (d_out, d_in), minval=-limit, maxval=limit, dtype=jnp.float32
    )
    bias = jnp.zeros((d_out,), dtype=jnp.float32)

    # BatchNorm1d params / running stats (non-trivial to exercise the folded path).
    gamma = jax.random.uniform(k_g, (d_out,), minval=0.5, maxval=1.5, dtype=jnp.float32)
    beta = 0.1 * jax.random.normal(k_b, (d_out,), dtype=jnp.float32)
    running_mean = 0.1 * jax.random.normal(k_m, (d_out,), dtype=jnp.float32)
    running_var = jax.random.uniform(k_v, (d_out,), minval=0.5, maxval=1.5, dtype=jnp.float32)

    # One-time parameter prep (transpose + bf16 cast + BN fold hoisted out of the call).
    wt_bf16, packed = prepare_mlp_block_params(
        weight, bias, gamma, beta, running_mean, running_var, eps=eps
    )

    out = mlp_block_forward(x, wt_bf16, packed)
    out = jax.block_until_ready(out)

    # Reference 1: same bf16-rounded operands, f32 math (tight tolerance).
    x_r = x.astype(jnp.bfloat16).astype(jnp.float32)
    w_r = weight.astype(jnp.bfloat16).astype(jnp.float32)
    h = jnp.maximum(x_r @ w_r.T + bias, 0.0)
    ref_bf = gamma * (h - running_mean) / jnp.sqrt(running_var + eps) + beta

    # Reference 2: pure f32 eval-mode forward (loose tolerance, semantics check).
    h32 = jnp.maximum(x @ weight.T + bias, 0.0)
    ref_f32 = gamma * (h32 - running_mean) / jnp.sqrt(running_var + eps) + beta

    assert out.shape == (M, d_out), out.shape
    assert out.dtype == jnp.float32, out.dtype
    assert jnp.allclose(out, ref_bf, atol=2e-3, rtol=2e-3), float(
        jnp.max(jnp.abs(out - ref_bf))
    )
    assert jnp.allclose(out, ref_f32, atol=5e-2, rtol=5e-2), float(
        jnp.max(jnp.abs(out - ref_f32))
    )

    print("KERNEL_OK")
</pallas_src>

<mosaic_0001>
module attributes {stable_mosaic.version = 11 : i64} {
  func.func @_mlp_block_kernel(%arg0: i32, %arg1: i32, %arg2: i32, %arg3: memref<64x128xbf16, #tpu.memory_space<vmem>>, %arg4: memref<128x128xbf16, #tpu.memory_space<vmem>>, %arg5: memref<3x128xf32, #tpu.memory_space<vmem>>, %arg6: memref<64x128xf32, #tpu.memory_space<vmem>>) attributes {dimension_semantics = [#tpu.dimension_semantics<parallel>, #tpu.dimension_semantics<parallel>, #tpu.dimension_semantics<arbitrary>], iteration_bounds = array<i64: 1, 2, 1>, scalar_prefetch = 0 : i64, scratch_operands = 0 : i64, tpu.core_type = #tpu.core_type<tc>, window_params = [{transform_indices = @transform_0, window_bounds = array<i64: 64, 128>}, {transform_indices = @transform_1, window_bounds = array<i64: 128, 128>}, {transform_indices = @transform_2, window_bounds = array<i64: 3, 128>}, {transform_indices = @transform_3, window_bounds = array<i64: 64, 128>}]} {
    %c0 = arith.constant 0 : index
    %c0_0 = arith.constant 0 : index
    %0 = vector.load %arg3[%c0, %c0_0] : memref<64x128xbf16, #tpu.memory_space<vmem>>, vector<64x128xbf16>
    %c0_1 = arith.constant 0 : index
    %c0_2 = arith.constant 0 : index
    %1 = vector.load %arg4[%c0_1, %c0_2] : memref<128x128xbf16, #tpu.memory_space<vmem>>, vector<128x128xbf16>
    %cst = arith.constant dense<0.000000e+00> : vector<64x128xf32>
    %2 = tpu.matmul %0, %1, %cst {dimension_numbers = #tpu.dot_dimension_numbers<[1], [0], [0], [1], [0, 0, 1, 1], [], []>} : vector<64x128xbf16>, vector<128x128xbf16>, vector<64x128xf32> -> vector<64x128xf32>
    %c0_i32 = arith.constant 0 : i32
    %3 = arith.cmpi eq, %arg2, %c0_i32 : i32
    %4 = arith.extui %3 : i1 to i32
    %c0_i32_3 = arith.constant 0 : i32
    %5 = arith.cmpi ne, %4, %c0_i32_3 : i32
    scf.if %5 {
      %c0_8 = arith.constant 0 : index
      %c0_9 = arith.constant 0 : index
      %12 = vector.load %arg6[%c0_8, %c0_9] : memref<64x128xf32, #tpu.memory_space<vmem>>, vector<64x128xf32>
      tpu.vector_store %arg6[%c0_8, %c0_9], %2 {strides = array<i32>} : memref<64x128xf32, #tpu.memory_space<vmem>>, vector<64x128xf32>,
    } else {
    }
    %c0_i32_4 = arith.constant 0 : i32
    %6 = arith.cmpi sgt, %arg2, %c0_i32_4 : i32
    %7 = arith.extui %6 : i1 to i32
    %c0_i32_5 = arith.constant 0 : i32
    %8 = arith.cmpi ne, %7, %c0_i32_5 : i32
    scf.if %8 {
      %c0_8 = arith.constant 0 : index
      %c0_9 = arith.constant 0 : index
      %12 = vector.load %arg6[%c0_8, %c0_9] : memref<64x128xf32, #tpu.memory_space<vmem>>, vector<64x128xf32>
      %13 = arith.addf %12, %2 : vector<64x128xf32>
      %c0_10 = arith.constant 0 : index
      %c0_11 = arith.constant 0 : index
      %14 = vector.load %arg6[%c0_10, %c0_11] : memref<64x128xf32, #tpu.memory_space<vmem>>, vector<64x128xf32>
      tpu.vector_store %arg6[%c0_10, %c0_11], %13 {strides = array<i32>} : memref<64x128xf32, #tpu.memory_space<vmem>>, vector<64x128xf32>,
    } else {
    }
    %c0_i32_6 = arith.constant 0 : i32
    %9 = arith.cmpi eq, %arg2, %c0_i32_6 : i32
    %10 = arith.extui %9 : i1 to i32
    %c0_i32_7 = arith.constant 0 : i32
    %11 = arith.cmpi ne, %10, %c0_i32_7 : i32
    scf.if %11 {
      %c0_8 = arith.constant 0 : index
      %c0_9 = arith.constant 0 : index
      %12 = vector.load %arg5[%c0_8, %c0_9] : memref<3x128xf32, #tpu.memory_space<vmem>>, vector<1x128xf32>
      %c1 = arith.constant 1 : index
      %c0_10 = arith.constant 0 : index
      %13 = vector.load %arg5[%c1, %c0_10] : memref<3x128xf32, #tpu.memory_space<vmem>>, vector<1x128xf32>
      %c2 = arith.constant 2 : index
      %c0_11 = arith.constant 0 : index
      %14 = vector.load %arg5[%c2, %c0_11] : memref<3x128xf32, #tpu.memory_space<vmem>>, vector<1x128xf32>
      %c0_12 = arith.constant 0 : index
      %c0_13 = arith.constant 0 : index
      %15 = vector.load %arg6[%c0_12, %c0_13] : memref<64x128xf32, #tpu.memory_space<vmem>>, vector<64x128xf32>
      %16 = vector.broadcast %12 : vector<1x128xf32> to vector<64x128xf32>
      %17 = arith.addf %15, %16 : vector<64x128xf32>
      %cst_14 = arith.constant 0.000000e+00 : f32
      %18 = vector.broadcast %cst_14 : f32 to vector<64x128xf32>
      %19 = arith.maximumf %17, %18 : vector<64x128xf32>
      %20 = vector.broadcast %13 : vector<1x128xf32> to vector<64x128xf32>
      %21 = arith.mulf %19, %20 : vector<64x128xf32>
      %22 = vector.broadcast %14 : vector<1x128xf32> to vector<64x128xf32>
      %23 = arith.addf %21, %22 : vector<64x128xf32>
      %c0_15 = arith.constant 0 : index
      %c0_16 = arith.constant 0 : index
      %24 = vector.load %arg6[%c0_15, %c0_16] : memref<64x128xf32, #tpu.memory_space<vmem>>, vector<64x128xf32>
      tpu.vector_store %arg6[%c0_15, %c0_16], %23 {strides = array<i32>} : memref<64x128xf32, #tpu.memory_space<vmem>>, vector<64x128xf32>,
    } else {
    }
    return
  }
  func.func @transform_0(%arg0: i32, %arg1: i32, %arg2: i32) -> (i32, i32) {
    %c0_i32 = arith.constant 0 : i32
    return %arg0, %arg2 : i32, i32
  }
  func.func @transform_1(%arg0: i32, %arg1: i32, %arg2: i32) -> (i32, i32) {
    %c0_i32 = arith.constant 0 : i32
    return %arg2, %arg1 : i32, i32
  }
  func.func @transform_2(%arg0: i32, %arg1: i32, %arg2: i32) -> (i32, i32) {
    %c0_i32 = arith.constant 0 : i32
    %c0_i32_0 = arith.constant 0 : i32
    return %c0_i32, %arg1 : i32, i32
  }
  func.func @transform_3(%arg0: i32, %arg1: i32, %arg2: i32) -> (i32, i32) {
    %c0_i32 = arith.constant 0 : i32
    return %arg0, %arg1 : i32, i32
  }
}

</mosaic_0001>

<llo_original>
// kernel: tpu_custom_call.1
$region0: #{tpu_custom_call.1}
  #allocation0 [shape = 'u32[]', space=smem, size = 0x4, offset = 0x4, fixed_abs, tag = 'smem constant byte address 0x4 - core index']
  #allocation1 [shape = 'u32[144,128]{1,0:T(1,128)}', space=vmem, size = 0x12000, scoped, tag = 'internal scratch']
  %s0 = inlined_call_operand.hbm [shape: bf16[64,128], index: 0, kind: input, shape index: {}]
  %s1 = inlined_call_operand.hbm [shape: bf16[128,256], index: 1, kind: input, shape index: {}]
  %s2 = inlined_call_operand.hbm [shape: f32[3,256], index: 2, kind: input, shape index: {}]
  %s3 = inlined_call_operand.hbm [shape: f32[64,256], index: 3, kind: output, shape index: {}]
  %s4 = sld [smem:[#allocation0]]
  $region69: #{tpu_custom_call.1} parent=0
    _
  %s6 = ssub.s32 1, %s4
  %s7 = scalar_select 0, %s6, %s4
  $region1: #{tpu_custom_call.1} parent=0
    #allocation2 [shape = 'u8[16384]{0}', space=vmem, size = 0x4000, scoped, tag = 'input window, operand 0, single buffered']
    #allocation3 [shape = 's32[2]{0}', space=sflag, size = 0x8, scoped, tag = 'scoped memory for tpu_custom_call.1']
    #allocation4 [shape = 's32[2]{0}', space=sflag, size = 0x8, scoped, tag = 'scoped memory for tpu_custom_call.1']
    #allocation5 [shape = 'u8[65536]{0}', space=vmem, size = 0x10000, scoped, tag = 'input window, operand 1']
    #allocation6 [shape = 's32[2]{0}', space=sflag, size = 0x8, scoped, tag = 'scoped memory for tpu_custom_call.1']
    #allocation7 [shape = 'u8[4096]{0}', space=vmem, size = 0x1000, scoped, tag = 'input window, operand 2']
    #allocation8 [shape = 'u8[65536]{0}', space=vmem, size = 0x10000, scoped, tag = 'output window, operand 0']
    %8 = vsyncpa [#allocation3], 0
    %9 = vsyncpa [#allocation6], 0
    %s10 = scalar_lea.sflag [#allocation6], 1
    %11 = vsyncpa %s10, 0
    %12 = vsyncpa [#allocation4], 0
    %s13 = scalar_lea.sflag [#allocation4], 1
    %14 = vsyncpa %s13, 0
    loop: start=0, step=1, limit=4
    $region2: #{tpu_custom_call.1} parent=1 // loop_pre_header
      _
    $region3: #{tpu_custom_call.1} parent=1 // loop_header
      %s16 = sphi 0, %s20
      %p17 = scmp.ge.s32.totalorder %s16, 4
      %s23 = sphi 0, %s42
      %s24 = sphi 0, %s38
      %s25 = sphi 0, %s34
      %s26 = sphi 0, %s23
      %s27 = sphi 0, %s24
      %s28 = sphi 0, %s25
      %s29 = sphi 0, %s26
      %s30 = sphi 0, %s27
      %s31 = sphi 0, %s28
      %s47 = sphi 0, %s49
      %s50 = sphi 0, %s47
      %s51 = sphi 0, %s50
      %s67 = sphi 0, %s51
      %s75 = sphi 0, %s77
      %s78 = sphi 0, %s75
      %s79 = sphi 0, %s78
      %s95 = sphi 0, %s79
      %s101 = sphi 0, %s103
      %s104 = sphi 0, %s101
      %s105 = sphi 0, %s104
      %s121 = sphi 0, %s105
      %s129 = sphi 0, %s131
      %s132 = sphi 0, %s129
      %s133 = sphi 0, %s132
      %s149 = sphi 0, %s133
    $region4: #{tpu_custom_call.1} parent=1 // loop_header_branch
      %19 = sbr.rel (%p17) target = $region8
    $region5: #{tpu_custom_call.1} parent=1 // loop_body
      %s21 = ssub.s32 %s16, 1
      %s22 = ssub.s32 %s16, 2
      %s32 = sadd.s32 1, %s25
      %p33 = scmp.ge.s32.totalorder %s32, 1
      %s34 = scalar_select %p33, 0, %s32
      %s35 = sadd.s32 1, %s24
      %s36 = scalar_select %p33, %s35, %s24
      %p37 = scmp.ge.s32.totalorder %s36, 2
      %s38 = scalar_select %p37, 0, %s36
      %s39 = sadd.s32 1, %s23
      %s40 = scalar_select %p37, %s39, %s23
      %p41 = scmp.ge.s32.totalorder %s40, 1
      %s42 = scalar_select %p41, 0, %s40
      %s43 = ssub.s32 %s23, %s42
      %s44 = ssub.s32 %s25, %s34
      %s45 = sor.u32 %s43, %s44
      %p46 = scmp.eq.s32.totalorder %s45, 0
      %s48 = sadd.s32 %s47, 1
      %s49 = scalar_select %p46, %s47, %s48
      %p52 = pneg %p46
      %p53 = scmp.eq.s32.totalorder %s16, 1
      %p54 = por %p52, %p53
      %p55 = scmp.ne.s32.totalorder %s47, %s50
      %p56 = scmp.eq.s32.totalorder %s16, 0
      %p57 = por %p55, %p56
      %p58 = scmp.ne.s32.totalorder %s47, %s50
      %p59 = scmp.eq.s32.totalorder %s21, 1
      %p60 = por %p58, %p59
      %p61 = scmp.ne.s32.totalorder %s50, %s51
      %p62 = scmp.eq.s32.totalorder %s21, 0
      %p63 = por %p61, %p62
      %p64 = scmp.ne.s32.totalorder %s50, %s51
      %p65 = scmp.eq.s32.totalorder %s22, 1
      %p66 = por %p64, %p65
      %p68 = scmp.ne.s32.totalorder %s51, %s67
      %p69 = scmp.eq.s32.totalorder %s22, 0
      %p70 = por %p68, %p69
      %s71 = ssub.s32 %s25, %s34
      %s72 = ssub.s32 %s24, %s38
      %s73 = sor.u32 %s71, %s72
      %p74 = scmp.eq.s32.totalorder %s73, 0
      %s76 = sadd.s32 %s75, 1
      %s77 = scalar_select %p74, %s75, %s76
      %p80 = pneg %p74
      %p81 = scmp.eq.s32.totalorder %s16, 1
      %p82 = por %p80, %p81
      %p83 = scmp.ne.s32.totalorder %s75, %s78
      %p84 = scmp.eq.s32.totalorder %s16, 0
      %p85 = por %p83, %p84
      %p86 = scmp.ne.s32.totalorder %s75, %s78
      %p87 = scmp.eq.s32.totalorder %s21, 1
      %p88 = por %p86, %p87
      %p89 = scmp.ne.s32.totalorder %s78, %s79
      %p90 = scmp.eq.s32.totalorder %s21, 0
      %p91 = por %p89, %p90
      %p92 = scmp.ne.s32.totalorder %s78, %s79
      %p93 = scmp.eq.s32.totalorder %s22, 1
      %p94 = por %p92, %p93
      %p96 = scmp.ne.s32.totalorder %s79, %s95
      %p97 = scmp.eq.s32.totalorder %s22, 0
      %p98 = por %p96, %p97
      %s99 = ssub.s32 %s24, %s38
      %p100 = scmp.eq.s32.totalorder %s99, 0
      %s102 = sadd.s32 %s101, 1
      %s103 = scalar_select %p100, %s101, %s102
      %p106 = pneg %p100
      %p107 = scmp.eq.s32.totalorder %s16, 1
      %p108 = por %p106, %p107
      %p109 = scmp.ne.s32.totalorder %s101, %s104
      %p110 = scmp.eq.s32.totalorder %s16, 0
      %p111 = por %p109, %p110
      %p112 = scmp.ne.s32.totalorder %s101, %s104
      %p113 = scmp.eq.s32.totalorder %s21, 1
      %p114 = por %p112, %p113
      %p115 = scmp.ne.s32.totalorder %s104, %s105
      %p116 = scmp.eq.s32.totalorder %s21, 0
      %p117 = por %p115, %p116
      %p118 = scmp.ne.s32.totalorder %s104, %s105
      %p119 = scmp.eq.s32.totalorder %s22, 1
      %p120 = por %p118, %p119
      %p122 = scmp.ne.s32.totalorder %s105, %s121
      %p123 = scmp.eq.s32.totalorder %s22, 0
      %p124 = por %p122, %p123
      %s125 = ssub.s32 %s23, %s42
      %s126 = ssub.s32 %s24, %s38
      %s127 = sor.u32 %s125, %s126
      %p128 = scmp.eq.s32.totalorder %s127, 0
      %s130 = sadd.s32 %s129, 1
      %s131 = scalar_select %p128, %s129, %s130
      %p134 = pneg %p128
      %p135 = scmp.eq.s32.totalorder %s16, 1
      %p136 = por %p134, %p135
      %p137 = scmp.ne.s32.totalorder %s129, %s132
      %p138 = scmp.eq.s32.totalorder %s16, 0
      %p139 = por %p137, %p138
      %p140 = scmp.ne.s32.totalorder %s129, %s132
      %p141 = scmp.eq.s32.totalorder %s21, 1
      %p142 = por %p140, %p141
      %p143 = scmp.ne.s32.totalorder %s132, %s133
      %p144 = scmp.eq.s32.totalorder %s21, 0
      %p145 = por %p143, %p144
      %p146 = scmp.ne.s32.totalorder %s132, %s133
      %p147 = scmp.eq.s32.totalorder %s22, 1
      %p148 = por %p146, %p147
      %p150 = scmp.ne.s32.totalorder %s133, %s149
      %p151 = scmp.eq.s32.totalorder %s22, 0
      %p152 = por %p150, %p151
      %p153 = scmp.le.s32.totalorder 1, %s16
      %p154 = scmp.lt.s32.totalorder %s16, 3
      %p155 = pnand %p153, %p154
      %p156 = pneg %p155
      // Predicated region
      $region9: #{tpu_custom_call.1} parent=5 // pred_check
        _
      $region10: #{tpu_custom_call.1} parent=5 // pred_check_branch
        %158 = sbr.rel (%p155) target = $region12
      $region11: #{tpu_custom_call.1} parent=5 // pred_region
        %s159 = ssub.s32 %s16, 1
        // Predicated region
        $region13: #{tpu_custom_call.1} parent=11 // pred_check
          %p160 = pneg %p63
        $region14: #{tpu_custom_call.1} parent=11 // pred_check_branch
          %162 = sbr.rel (%p160) target = $region16
        $region15: #{tpu_custom_call.1} parent=11 // pred_region
          %s163 = smul.u32 8, %s26
          %s165 = ssub.s32 512, 512
          %166 = vsyncadd [#allocation3], %s165
          %s167 = sadd.s32 %s28, %s163
          %s168 = smul.addr %s167, 64
          %s169 = scalar_lea.hbm %s0, %s168
          %s170 = sshll.u32 [#allocation2], 4
          %s171 = int_to_ptr.vmem [resolvable:$true] %s170
          %176 = dma.hbm_to_vmem [thread:$0]  %s169, 512, %s171, [#allocation3], 64, 64, 4
        $region16: #{tpu_custom_call.1} parent=11 // pred_fallthru
          _
      $region12: #{tpu_custom_call.1} parent=5 // pred_fallthru
        _
      %p177 = scmp.lt.s32.totalorder %s16, 2
      // Predicated region
      $region17: #{tpu_custom_call.1} parent=5 // pred_check
        %p178 = pneg %p177
      $region18: #{tpu_custom_call.1} parent=5 // pred_check_branch
        %180 = sbr.rel (%p178) target = $region20
      $region19: #{tpu_custom_call.1} parent=5 // pred_region
        // Predicated region
        $region21: #{tpu_custom_call.1} parent=19 // pred_check
          %p181 = pneg %p85
        $region22: #{tpu_custom_call.1} parent=19 // pred_check_branch
          %183 = sbr.rel (%p181) target = $region24
        $region23: #{tpu_custom_call.1} parent=19 // pred_region
          %s184 = sand.u32 %s16, 1
          %s185 = scalar_lea.sflag [#allocation6], %s184
          %s186 = sand.u32 %s75, 1
          %s187 = smul.addr %s186, 64
          %s188 = scalar_lea.vmem [#allocation5], %s187
          %s189 = smul.u32 16, %s25
          %s191 = ssub.s32 1024, 1024
          %192 = vsyncadd %s185, %s191
          %s193 = smul.addr %s189, 2
          %s194 = sadd.s32 %s24, %s193
          %s195 = smul.addr %s194, 64
          %s196 = scalar_lea.hbm %s1, %s195
          %s197 = sshll.u32 %s188, 4
          %s198 = int_to_ptr.vmem [resolvable:$true] %s197
          %203 = dma.hbm_to_vmem [thread:$0]  %s196, 1024, %s198, %s185, 128, 64, 4
        $region24: #{tpu_custom_call.1} parent=19 // pred_fallthru
          _
        // Predicated region
        $region25: #{tpu_custom_call.1} parent=19 // pred_check
          %p204 = pneg %p111
        $region26: #{tpu_custom_call.1} parent=19 // pred_check_branch
          %206 = sbr.rel (%p204) target = $region28
        $region27: #{tpu_custom_call.1} parent=19 // pred_region
          %s207 = sand.u32 %s16, 1
          %s208 = scalar_lea.sflag [#allocation6], %s207
          %s209 = sand.u32 %s101, 1
          %s210 = smul.addr %s209, 4
          %s211 = scalar_lea.vmem [#allocation7], %s210
          %s213 = ssub.s32 64, 64
          %214 = vsyncadd %s208, %s213
          %s215 = smul.addr %s24, 64
          %s216 = scalar_lea.hbm %s2, %s215
          %s218 = sshll.u32 %s211, 4
          %s219 = int_to_ptr.vmem [resolvable:$true] %s218
          %221 = dma.hbm_to_vmem [thread:$0]  %s216, 64, %s219, %s208
        $region28: #{tpu_custom_call.1} parent=19 // pred_fallthru
          _
      $region20: #{tpu_custom_call.1} parent=5 // pred_fallthru
        _
      %p222 = scmp.le.s32.totalorder 1, %s16
      %p223 = scmp.lt.s32.totalorder %s16, 3
      %p224 = pnand %p222, %p223
      %p225 = pneg %p224
      // Predicated region
      $region29: #{tpu_custom_call.1} parent=5 // pred_check
        _
      $region30: #{tpu_custom_call.1} parent=5 // pred_check_branch
        %227 = sbr.rel (%p224) target = $region32
      $region31: #{tpu_custom_call.1} parent=5 // pred_region
        %s228 = ssub.s32 %s16, 1
        // Predicated region
        $region33: #{tpu_custom_call.1} parent=31 // pred_check
          %p229 = pneg %p63
        $region34: #{tpu_custom_call.1} parent=31 // pred_check_branch
          %231 = sbr.rel (%p229) target = $region36
        $region35: #{tpu_custom_call.1} parent=31 // pred_region
          %232 = dma.done [#allocation3], 512
        $region36: #{tpu_custom_call.1} parent=31 // pred_fallthru
          _
        %s233 = sand.u32 %s21, 1
        %s234 = scalar_lea.sflag [#allocation6], %s233
        %s235 = sand.u32 %s78, 1
        %s236 = smul.addr %s235, 64
        %s237 = scalar_lea.vmem [#allocation5], %s236
        // Predicated region
        $region37: #{tpu_custom_call.1} parent=31 // pred_check
          %p238 = pneg %p91
        $region38: #{tpu_custom_call.1} parent=31 // pred_check_branch
          %240 = sbr.rel (%p238) target = $region40
        $region39: #{tpu_custom_call.1} parent=31 // pred_region
          %241 = dma.done %s234, 1024
        $region40: #{tpu_custom_call.1} parent=31 // pred_fallthru
          _
        %s242 = sand.u32 %s21, 1
        %s243 = scalar_lea.sflag [#allocation6], %s242
        %s244 = sand.u32 %s104, 1
        %s245 = smul.addr %s244, 4
        %s246 = scalar_lea.vmem [#allocation7], %s245
        // Predicated region
        $region41: #{tpu_custom_call.1} parent=31 // pred_check
          %p247 = pneg %p117
        $region42: #{tpu_custom_call.1} parent=31 // pred_check_branch
          %249 = sbr.rel (%p247) target = $region44
        $region43: #{tpu_custom_call.1} parent=31 // pred_region
          %250 = dma.done %s243, 64
        $region44: #{tpu_custom_call.1} parent=31 // pred_fallthru
          _
        %p251 = pneg %p63
        %p252 = pneg %p60
        %s253 = sand.u32 %s21, 1
        %s254 = scalar_lea.sflag [#allocation6], %s253
        %s255 = sand.u32 %s78, 1
        %s256 = smul.addr %s255, 64
        %s257 = scalar_lea.vmem [#allocation5], %s256
        %p258 = pneg %p91
        %p259 = pneg %p88
        %s260 = sand.u32 %s21, 1
        %s261 = scalar_lea.sflag [#allocation6], %s260
        %s262 = sand.u32 %s104, 1
        %s263 = smul.addr %s262, 4
        %s264 = scalar_lea.vmem [#allocation7], %s263
        %p265 = pneg %p117
        %p266 = pneg %p114
        %p267 = pneg %p145
        %p268 = pneg %p142
        %s269 = sand.u32 %s132, 1
        %s270 = scalar_lea.sflag [#allocation4], %s269
        %s271 = sand.u32 %s132, 1
        %s272 = smul.addr %s271, 64
        %s273 = scalar_lea.vmem [#allocation8], %s272
        %s274 = smul.u32 8, %s26
        %s275 = smul.u32 16, %s28
        %s276 = smul.u32 8, %s26
        %v278 = vld [vmem:[#allocation2] sm:$0xf]
        %v279 = vld [vmem:[#allocation2 + $0x4] sm:$0xf]
        %v280 = vld [vmem:[#allocation2 + $0x8] sm:$0xf]
        %v281 = vld [vmem:[#allocation2 + $0xc] sm:$0xf]
        %v282 = vld [vmem:[#allocation2 + $0x10] sm:$0xf]
        %v283 = vld [vmem:[#allocation2 + $0x14] sm:$0xf]
        %v284 = vld [vmem:[#allocation2 + $0x18] sm:$0xf]
        %v285 = vld [vmem:[#allocation2 + $0x1c] sm:$0xf]
        %v286 = vld [vmem:[%s237] sm:$0xf]
        %v287 = vld [vmem:[%s237 + $0x4] sm:$0xf]
        %v288 = vld [vmem:[%s237 + $0x8] sm:$0xf]
        %v289 = vld [vmem:[%s237 + $0xc] sm:$0xf]
        %v290 = vld [vmem:[%s237 + $0x10] sm:$0xf]
        %v291 = vld [vmem:[%s237 + $0x14] sm:$0xf]
        %v292 = vld [vmem:[%s237 + $0x18] sm:$0xf]
        %v293 = vld [vmem:[%s237 + $0x1c] sm:$0xf]
        %v294 = vld [vmem:[%s237 + $0x20] sm:$0xf]
        %v295 = vld [vmem:[%s237 + $0x24] sm:$0xf]
        %v296 = vld [vmem:[%s237 + $0x28] sm:$0xf]
        %v297 = vld [vmem:[%s237 + $0x2c] sm:$0xf]
        %v298 = vld [vmem:[%s237 + $0x30] sm:$0xf]
        %v299 = vld [vmem:[%s237 + $0x34] sm:$0xf]
        %v300 = vld [vmem:[%s237 + $0x38] sm:$0xf]
        %v301 = vld [vmem:[%s237 + $0x3c] sm:$0xf]
        %v310 = vunpack.c.l.b16 %v278
        %v311 = vunpack.c.l.b16 %v279
        %v312 = vunpack.c.l.b16 %v280
        %v313 = vunpack.c.l.b16 %v281
        %v314 = vunpack.c.l.b16 %v282
        %v315 = vunpack.c.l.b16 %v283
        %v316 = vunpack.c.l.b16 %v284
        %v317 = vunpack.c.l.b16 %v285
        %v318 = vpack.c.b16 %v311, %v310
        %v319 = vpack.c.b16 %v313, %v312
        %v320 = vpack.c.b16 %v315, %v314
        %v321 = vpack.c.b16 %v317, %v316
        %v342 = vunpack.c.l.b16 %v286
        %v343 = vunpack.c.l.b16 %v287
        %v344 = vunpack.c.l.b16 %v288
        %v345 = vunpack.c.l.b16 %v289
        %v346 = vunpack.c.l.b16 %v290
        %v347 = vunpack.c.l.b16 %v291
        %v348 = vunpack.c.l.b16 %v292
        %v349 = vunpack.c.l.b16 %v293
        %v350 = vunpack.c.l.b16 %v294
        %v351 = vunpack.c.l.b16 %v295
        %v352 = vunpack.c.l.b16 %v296
        %v353 = vunpack.c.l.b16 %v297
        %v354 = vunpack.c.l.b16 %v298
        %v355 = vunpack.c.l.b16 %v299
        %v356 = vunpack.c.l.b16 %v300
        %v357 = vunpack.c.l.b16 %v301
        %v358 = vpack.c.b16 %v343, %v342
        %v359 = vpack.c.b16 %v345, %v344
        %v360 = vpack.c.b16 %v347, %v346
        %v361 = vpack.c.b16 %v349, %v348
        %v362 = vpack.c.b16 %v351, %v350
        %v363 = vpack.c.b16 %v353, %v352
        %v364 = vpack.c.b16 %v355, %v354
        %v365 = vpack.c.b16 %v357, %v356
        %374 = vmatprep.subr.bf16.mxu0 0
        %375 = vmatpush1.bf16.msra.mxu0 %v358
        %376 = vmatprep.subr.bf16.mxu0 0
        %377 = vmatpush1.bf16.msra.mxu0 %v359
        %378 = vmatprep.subr.bf16.mxu0 0
        %379 = vmatpush1.bf16.msra.mxu0 %v360
        %380 = vmatprep.subr.bf16.mxu0 0
        %381 = vmatpush1.bf16.msra.mxu0 %v361
        %382 = vmatprep.subr.bf16.mxu0 0
        %383 = vmatpush1.bf16.msra.mxu0 %v362
        %384 = vmatprep.subr.bf16.mxu0 0
        %385 = vmatpush1.bf16.msra.mxu0 %v363
        %386 = vmatprep.subr.bf16.mxu0 0
        %387 = vmatpush1.bf16.msra.mxu0 %v364
        %388 = vmatprep.subr.bf16.mxu0 0
        %389 = vmatpush1.bf16.msra.mxu0 %v365
        %390 = vmatprep.subr.bf16.mxu0 0
        %391 = vmatpush1.bf16.msra.mxu0 0
        %392 = vmatprep.subr.bf16.mxu0 0
        %393 = vmatpush1.bf16.msra.mxu0 0
        %394 = vmatprep.subr.bf16.mxu0 0
        %395 = vmatpush1.bf16.msra.mxu0 0
        %396 = vmatprep.subr.bf16.mxu0 0
        %397 = vmatpush1.bf16.msra.mxu0 0
        %398 = vmatprep.subr.bf16.mxu0 0
        %399 = vmatpush1.bf16.msra.mxu0 0
        %400 = vmatprep.subr.bf16.mxu0 0
        %401 = vmatpush1.bf16.msra.mxu0 0
        %402 = vmatprep.subr.bf16.mxu0 0
        %403 = vmatpush1.bf16.msra.mxu0 0
        %404 = vmatprep.subr.bf16.mxu0 0
        %405 = vmatpush1.bf16.msra.mxu0 0
        %406 = vmatprep.mubr.bf16.mxu0 0
        %407 = vmatmul.mubr.bf16.gmra.mrb[0].mxu0 %v318
        %v408 = vpop.f32.mrb[0].mxu0
        %v409 = vadd.f32 0.0, %v408
        %v410 = vpop.f32.mrb[0].mxu0
        %v411 = vpop.f32.mrb[0].mxu0
        %v412 = vadd.f32 0.0, %v411
        %v413 = vpop.f32.mrb[0].mxu0
        %414 = vmatprep.mubr.bf16.mxu0 0
        %415 = vmatmul.mubr.bf16.gmra.mrb[0].mxu0 %v319
        %v416 = vpop.f32.mrb[0].mxu0
        %v417 = vadd.f32 0.0, %v416
        %v418 = vpop.f32.mrb[0].mxu0
        %v419 = vpop.f32.mrb[0].mxu0
        %v420 = vadd.f32 0.0, %v419
        %v421 = vpop.f32.mrb[0].mxu0
        %422 = vmatprep.mubr.bf16.mxu0 0
        %423 = vmatmul.mubr.bf16.gmra.mrb[0].mxu0 %v320
        %v424 = vpop.f32.mrb[0].mxu0
        %v425 = vadd.f32 0.0, %v424
        %v426 = vpop.f32.mrb[0].mxu0
        %v427 = vpop.f32.mrb[0].mxu0
        %v428 = vadd.f32 0.0, %v427
        %v429 = vpop.f32.mrb[0].mxu0
        %430 = vmatprep.mubr.bf16.mxu0 0
        %431 = vmatmul.mubr.bf16.gmra.mrb[0].mxu0 %v321
        %v432 = vpop.f32.mrb[0].mxu0
        %v433 = vadd.f32 0.0, %v432
        %v434 = vpop.f32.mrb[0].mxu0
        %v435 = vpop.f32.mrb[0].mxu0
        %v436 = vadd.f32 0.0, %v435
        %v437 = vpop.f32.mrb[0].mxu0
        %438 = vdwg.mxu0
        %p439 = scmp.eq.s32.totalorder %s28, 0
        // Predicated region
        $region45: #{tpu_custom_call.1} parent=31 // pred_check
          %p440 = pneg %p439
        $region46: #{tpu_custom_call.1} parent=31 // pred_check_branch
          %442 = sbr.rel (%p440) target = $region48
        $region47: #{tpu_custom_call.1} parent=31 // pred_region
          %443 = vst [vmem:[%s273] sm:$0xff] %v409
          %444 = vst [vmem:[%s273 + $0x8] sm:$0xff] %v412
          %445 = vst [vmem:[%s273 + $0x10] sm:$0xff] %v417
          %446 = vst [vmem:[%s273 + $0x18] sm:$0xff] %v420
          %447 = vst [vmem:[%s273 + $0x20] sm:$0xff] %v425
          %448 = vst [vmem:[%s273 + $0x28] sm:$0xff] %v428
          %449 = vst [vmem:[%s273 + $0x30] sm:$0xff] %v433
          %450 = vst [vmem:[%s273 + $0x38] sm:$0xff] %v436
        $region48: #{tpu_custom_call.1} parent=31 // pred_fallthru
          _
        %p451 = scmp.gt.s32.totalorder %s28, 0
        // Predicated region
        $region49: #{tpu_custom_call.1} parent=31 // pred_check
          %p452 = pneg %p451
        $region50: #{tpu_custom_call.1} parent=31 // pred_check_branch
          %454 = sbr.rel (%p452) target = $region52
        $region51: #{tpu_custom_call.1} parent=31 // pred_region
          %v455 = vld [vmem:[%s273] sm:$0xff]
          %v456 = vld [vmem:[%s273 + $0x8] sm:$0xff]
          %v457 = vld [vmem:[%s273 + $0x10] sm:$0xff]
          %v458 = vld [vmem:[%s273 + $0x18] sm:$0xff]
          %v459 = vld [vmem:[%s273 + $0x20] sm:$0xff]
          %v460 = vld [vmem:[%s273 + $0x28] sm:$0xff]
          %v461 = vld [vmem:[%s273 + $0x30] sm:$0xff]
          %v462 = vld [vmem:[%s273 + $0x38] sm:$0xff]
          %v463 = vadd.f32 %v455, %v409
          %v464 = vadd.f32 %v456, %v412
          %v465 = vadd.f32 %v457, %v417
          %v466 = vadd.f32 %v458, %v420
          %v467 = vadd.f32 %v459, %v425
          %v468 = vadd.f32 %v460, %v428
          %v469 = vadd.f32 %v461, %v433
          %v470 = vadd.f32 %v462, %v436
          %471 = vst [vmem:[%s273] sm:$0xff] %v463
          %472 = vst [vmem:[%s273 + $0x8] sm:$0xff] %v464
          %473 = vst [vmem:[%s273 + $0x10] sm:$0xff] %v465
          %474 = vst [vmem:[%s273 + $0x18] sm:$0xff] %v466
          %475 = vst [vmem:[%s273 + $0x20] sm:$0xff] %v467
          %476 = vst [vmem:[%s273 + $0x28] sm:$0xff] %v468
          %477 = vst [vmem:[%s273 + $0x30] sm:$0xff] %v469
          %478 = vst [vmem:[%s273 + $0x38] sm:$0xff] %v470
        $region52: #{tpu_custom_call.1} parent=31 // pred_fallthru
          _
        // Predicated region
        $region53: #{tpu_custom_call.1} parent=31 // pred_check
          %p479 = pneg %p439
        $region54: #{tpu_custom_call.1} parent=31 // pred_check_branch
          %481 = sbr.rel (%p479) target = $region56
        $region55: #{tpu_custom_call.1} parent=31 // pred_region
          %v482 = vld [vmem:[%s246] sm:$0x1]
          %v483 = vld [vmem:[%s246 + $0x1] sm:$0x1]
          %v484 = vld [vmem:[%s246 + $0x2] sm:$0x1]
          %v485 = vld [vmem:[%s273] sm:$0xff]
          %v486 = vld [vmem:[%s273 + $0x8] sm:$0xff]
          %v487 = vld [vmem:[%s273 + $0x10] sm:$0xff]
          %v488 = vld [vmem:[%s273 + $0x18] sm:$0xff]
          %v489 = vld [vmem:[%s273 + $0x20] sm:$0xff]
          %v490 = vld [vmem:[%s273 + $0x28] sm:$0xff]
          %v491 = vld [vmem:[%s273 + $0x30] sm:$0xff]
          %v492 = vld [vmem:[%s273 + $0x38] sm:$0xff]
          %v493 = vlaneseq
          %v494 = vshrl.u32 %v493, 7
          %v495 = vsub.s32 0, %v494
          %v496 = vrot.slane %v482, %v495
          %v497 = vadd.f32 %v485, %v496
          %v498 = vadd.f32 %v486, %v496
          %v499 = vadd.f32 %v487, %v496
          %v500 = vadd.f32 %v488, %v496
          %v501 = vadd.f32 %v489, %v496
          %v502 = vadd.f32 %v490, %v496
          %v503 = vadd.f32 %v491, %v496
          %v504 = vadd.f32 %v492, %v496
          %v505 = vmax.f32 %v497, 0.0
          %v506 = vmax.f32 %v498, 0.0
          %v507 = vmax.f32 %v499, 0.0
          %v508 = vmax.f32 %v500, 0.0
          %v509 = vmax.f32 %v501, 0.0
          %v510 = vmax.f32 %v502, 0.0
          %v511 = vmax.f32 %v503, 0.0
          %v512 = vmax.f32 %v504, 0.0
          %v513 = vlaneseq
          %v514 = vshrl.u32 %v513, 7
          %v515 = vsub.s32 0, %v514
          %v516 = vrot.slane %v483, %v515
          %v517 = vmul.f32 %v505, %v516
          %v518 = vmul.f32 %v506, %v516
          %v519 = vmul.f32 %v507, %v516
          %v520 = vmul.f32 %v508, %v516
          %v521 = vmul.f32 %v509, %v516
          %v522 = vmul.f32 %v510, %v516
          %v523 = vmul.f32 %v511, %v516
          %v524 = vmul.f32 %v512, %v516
          %v525 = vlaneseq
          %v526 = vshrl.u32 %v525, 7
          %v527 = vsub.s32 0, %v526
          %v528 = vrot.slane %v484, %v527
          %v529 = vadd.f32 %v517, %v528
          %v530 = vadd.f32 %v518, %v528
          %v531 = vadd.f32 %v519, %v528
          %v532 = vadd.f32 %v520, %v528
          %v533 = vadd.f32 %v521, %v528
          %v534 = vadd.f32 %v522, %v528
          %v535 = vadd.f32 %v523, %v528
          %v536 = vadd.f32 %v524, %v528
          %537 = vst [vmem:[%s273] sm:$0xff] %v529
          %538 = vst [vmem:[%s273 + $0x8] sm:$0xff] %v530
          %539 = vst [vmem:[%s273 + $0x10] sm:$0xff] %v531
          %540 = vst [vmem:[%s273 + $0x18] sm:$0xff] %v532
          %541 = vst [vmem:[%s273 + $0x20] sm:$0xff] %v533
          %542 = vst [vmem:[%s273 + $0x28] sm:$0xff] %v534
          %543 = vst [vmem:[%s273 + $0x30] sm:$0xff] %v535
          %544 = vst [vmem:[%s273 + $0x38] sm:$0xff] %v536
        $region56: #{tpu_custom_call.1} parent=31 // pred_fallthru
          _
        %s545 = sand.u32 %s132, 1
        %s546 = scalar_lea.sflag [#allocation4], %s545
        %s547 = sand.u32 %s132, 1
        %s548 = smul.addr %s547, 64
        %s549 = scalar_lea.vmem [#allocation8], %s548
        // Predicated region
        $region57: #{tpu_custom_call.1} parent=31 // pred_check
          %p550 = pneg %p142
        $region58: #{tpu_custom_call.1} parent=31 // pred_check_branch
          %552 = sbr.rel (%p550) target = $region60
        $region59: #{tpu_custom_call.1} parent=31 // pred_region
          %s553 = smul.u32 8, %s26
          %s555 = ssub.s32 1024, 1024
          %556 = vsyncadd %s546, %s555
          %s557 = smul.addr %s553, 2
          %s558 = sadd.s32 %s27, %s557
          %s559 = smul.addr %s558, 128
          %s560 = scalar_lea.hbm %s3, %s559
          %s561 = sshll.u32 %s549, 4
          %s562 = int_to_ptr.vmem [resolvable:$true] %s561
          %567 = dma.vmem_to_hbm [thread:$0]  %s562, 1024, %s560, %s546, 128, 256, 8
        $region60: #{tpu_custom_call.1} parent=31 // pred_fallthru
          _
      $region32: #{tpu_custom_call.1} parent=5 // pred_fallthru
        _
      %p568 = scmp.le.s32.totalorder 2, %s16
      // Predicated region
      $region61: #{tpu_custom_call.1} parent=5 // pred_check
        %p569 = pneg %p568
      $region62: #{tpu_custom_call.1} parent=5 // pred_check_branch
        %571 = sbr.rel (%p569) target = $region64
      $region63: #{tpu_custom_call.1} parent=5 // pred_region
        %s572 = ssub.s32 %s16, 2
        // Predicated region
        $region65: #{tpu_custom_call.1} parent=63 // pred_check
          %p573 = pneg %p148
        $region66: #{tpu_custom_call.1} parent=63 // pred_check_branch
          %575 = sbr.rel (%p573) target = $region68
        $region67: #{tpu_custom_call.1} parent=63 // pred_region
          %s576 = sand.u32 %s133, 1
          %s577 = scalar_lea.sflag [#allocation4], %s576
          %s578 = sand.u32 %s133, 1
          %s579 = smul.addr %s578, 64
          %s580 = scalar_lea.vmem [#allocation8], %s579
          %581 = dma.done %s577, 1024
        $region68: #{tpu_custom_call.1} parent=63 // pred_fallthru
          _
      $region64: #{tpu_custom_call.1} parent=5 // pred_fallthru
        _
    $region6: #{tpu_custom_call.1} parent=1 // loop_footer
      %s20 = sadd.s32 1, %s16
    $region7: #{tpu_custom_call.1} parent=1 // loop_footer_branch
      %15 = sbr.rel target = $region3
    $region8: #{tpu_custom_call.1} parent=1 // loop_exit
      _
    %582 = vsyncpa [#allocation3], 1
    %s583 = scalar_lea.sflag [#allocation3], 1
    %584 = vsyncpa %s583, 1
    %585 = vsyncpa [#allocation6], 1
    %s586 = scalar_lea.sflag [#allocation6], 1
    %587 = vsyncpa %s586, 1
    %588 = vsyncpa [#allocation4], 1
    %s589 = scalar_lea.sflag [#allocation4], 1
    %590 = vsyncpa %s589, 1

</llo_original>
